<compile_context>
chip_gen: v5e
topology: v5e:2x2
jax: 0.10.0
libtpu: 0.0.40
codegen_flags: <defaults>
</compile_context>

<pallas_src>
import jax
import jax.numpy as jnp
from jax.experimental import pallas as pl
from jax.experimental.pallas import tpu as pltpu


# Whole weight kept VMEM-resident (single copy) below this size; above it the
# kernel tiles N (output cols) and K (input cols).
_RESIDENT_W_MAX_BYTES = 4 * 1024 * 1024
# Budget for the row-scaled (x / out / acc) buffers when picking the row tile.
# Kept well under per-generation scoped-VMEM limits (16 MiB v5e default,
# 32 MiB v6e/v7x default, 64 MiB physical on v7x).
_ROW_TILE_VMEM_BUDGET = 16 * 1024 * 1024
_VMEM_LIMIT_BYTES = 32 * 1024 * 1024  # safe on v5e/v6e/v7x


def _round_up(x: int, m: int) -> int:
    return ((x + m - 1) // m) * m


def _largest_tile(n: int) -> int:
    for t in (512, 256, 128):
        if n % t == 0:
            return t
    return 128


def _bucket_rows(r: int, align: int) -> int:
    """Bucketed padded row count: multiples of `align` for tiny inputs,
    128-row buckets up to 2048 rows, 512-row buckets above.  Caps both the
    padding waste (<128 / <512 wasted rows) and the number of compiled
    variants for ragged workloads."""
    r = _round_up(max(r, 1), align)
    if r <= 128:
        return r
    if r <= 2048:
        return _round_up(r, 128)
    return _round_up(r, 512)


# ----------------------------------------------------------------------------
# Pallas kernel: one (tm, tn) output tile of y = x @ W + b with f32 VMEM
# accumulation over the K grid axis.
# ----------------------------------------------------------------------------
def _linear_kernel(x_ref, w_ref, b_ref, o_ref, acc_ref):
    # x_ref: (tm, tk)   w_ref: (tk, tn) (full (Hin_p, Hout_p) when resident)
    # b_ref: (1, tn)    o_ref: (tm, tn)  acc_ref: (tm, tn) f32 scratch
    k = pl.program_id(2)

    @pl.when(k == 0)
    def _init():
        acc_ref[...] = jnp.zeros_like(acc_ref)

    acc_ref[...] += jnp.dot(x_ref[...], w_ref[...],
                            preferred_element_type=jnp.float32)

    @pl.when(k == pl.num_programs(2) - 1)
    def _store():
        o_ref[...] = (acc_ref[...] + b_ref[...]).astype(o_ref.dtype)


def _fused_linear(x_pad, w_p, b_p, *, tm, tn, tk, resident_w, out_dtype):
    """One pallas_call over the whole (padded) concatenated input."""
    r_pad, hin_p = x_pad.shape
    hout_p = w_p.shape[1]
    grid = (r_pad // tm, hout_p // tn, hin_p // tk)

    if resident_w:
        # Whole weight lives in VMEM as a single (non-double-buffered) copy;
        # it is brought in from HBM exactly once per launch.
        w_spec = pl.BlockSpec(memory_space=pltpu.MemorySpace.VMEM)
    else:
        w_spec = pl.BlockSpec((tk, tn), lambda i, j, k: (k, j))

    return pl.pallas_call(
        _linear_kernel,
        out_shape=jax.ShapeDtypeStruct((r_pad, hout_p), out_dtype),
        grid_spec=pltpu.PrefetchScalarGridSpec(
            num_scalar_prefetch=0,
            grid=grid,
            in_specs=[
                pl.BlockSpec((tm, tk), lambda i, j, k: (i, k)),   # x row/K tile
                w_spec,                                           # weight
                pl.BlockSpec((1, tn), lambda i, j, k: (0, j)),    # bias (f32)
            ],
            out_specs=pl.BlockSpec((tm, tn), lambda i, j, k: (i, j)),
            scratch_shapes=[pltpu.VMEM((tm, tn), jnp.float32)],
        ),
        compiler_params=pltpu.CompilerParams(
            dimension_semantics=("parallel", "parallel", "arbitrary"),
            vmem_limit_bytes=_VMEM_LIMIT_BYTES,
        ),
    )(x_pad, w_p, b_p)


# ----------------------------------------------------------------------------
# VariableLengthWrapper equivalent: apply the inner Linear to a tensor or,
# element-wise, to a list of tensors of varying sequence length.  The list
# case is fused into ONE jit (concat + cast + pad + kernel + split).
# ----------------------------------------------------------------------------
class VariableLengthWrapperPallas:
    def __init__(self, w, b, compute_dtype=None, out_dtype=None,
                 block_n=None, block_k=None):
        hin, hout = int(w.shape[0]), int(w.shape[1])
        self.hin, self.hout = hin, hout
        # bf16 is MXU-native on v5e/v6e/v7x and halves input DMA; accumulation
        # stays f32.  Pass compute_dtype=jnp.float32 for exact-f32 parity.
        self.compute_dtype = (jnp.dtype(compute_dtype) if compute_dtype is not None
                              else jnp.dtype(jnp.bfloat16))
        self.out_dtype = None if out_dtype is None else jnp.dtype(out_dtype)
        self._row_align = max(8, 32 // self.compute_dtype.itemsize)  # 8 f32 / 16 bf16

        bytes_c = self.compute_dtype.itemsize
        hin_p, hout_p = _round_up(hin, 128), _round_up(hout, 128)
        if (block_n is None and block_k is None
                and hin_p * hout_p * bytes_c <= _RESIDENT_W_MAX_BYTES):
            self.resident_w = True
            self.tn, self.tk = hout_p, hin_p
        else:
            self.resident_w = False
            self.tn = int(block_n) if block_n is not None else _largest_tile(hout_p)
            self.tk = int(block_k) if block_k is not None else _largest_tile(hin_p)
            assert self.tn % 128 == 0 and self.tk % 128 == 0
            hout_p = _round_up(hout_p, self.tn)
            hin_p = _round_up(hin_p, self.tk)
        self.hin_p, self.hout_p = hin_p, hout_p

        # Hoisted once: dtype cast + lane-dense zero-padding of W and bias.
        self.w_p = jnp.pad(jnp.asarray(w).astype(self.compute_dtype),
                           ((0, hin_p - hin), (0, hout_p - hout)))
        self.b_p = jnp.pad(jnp.asarray(b).astype(jnp.float32).reshape(1, hout),
                           ((0, 0), (0, hout_p - hout)))

        # Whole forward (glue + kernel) under one jit per call signature.
        self._fwd_list = jax.jit(self._forward_list)
        self._fwd_single = jax.jit(self._forward_single)

    # -- row-tile selection (VMEM-budgeted, >=2 steps for v7x megacore) -----
    def _pick_tm(self, r_pad, out_bytes):
        if r_pad <= 64:
            return r_pad
        if r_pad <= 256:
            half = r_pad // 2
            # >=2 row steps so both v7x TensorCores get work; ~0.35us extra
            # per step is noise on single-core v5e/v6e.
            return half if half % self._row_align == 0 else r_pad
        per_row = (2 * self.tk * self.compute_dtype.itemsize   # x (double-buffered)
                   + 2 * self.tn * out_bytes                   # out (double-buffered)
                   + self.tn * 4)                              # f32 accumulator
        w_copies = 1 if self.resident_w else 2
        fixed = (w_copies * self.tk * self.tn * self.compute_dtype.itemsize
                 + 2 * self.tn * 4)
        cap = (_ROW_TILE_VMEM_BUDGET - fixed) // per_row
        cap = min(1024, max(128, (cap // 128) * 128))
        for t in (1024, 512, 256, 128):
            if t <= cap and r_pad % t == 0 and r_pad // t >= 2:
                return t
        return 128

    # -- traced helpers (run inside jit) ------------------------------------
    def _apply_rows(self, x, w_p, b_p):
        r = x.shape[0]
        out_dtype = self.out_dtype if self.out_dtype is not None else x.dtype
        r_pad = _bucket_rows(r, self._row_align)
        x = x.astype(self.compute_dtype)
        pad_r, pad_k = r_pad - r, self.hin_p - x.shape[1]
        if pad_r or pad_k:
            x = jnp.pad(x, ((0, pad_r), (0, pad_k)))
        tm = self._pick_tm(r_pad, jnp.dtype(out_dtype).itemsize)
        y = _fused_linear(x, w_p, b_p, tm=tm, tn=self.tn, tk=self.tk,
                          resident_w=self.resident_w, out_dtype=out_dtype)
        return y[:r, :self.hout]

    def _forward_single(self, x, w_p, b_p):
        return self._apply_rows(x, w_p, b_p)

    def _forward_list(self, xs, w_p, b_p):
        lengths = [int(t.shape[0]) for t in xs]
        x_cat = xs[0] if len(xs) == 1 else jnp.concatenate(xs, axis=0)
        y = self._apply_rows(x_cat, w_p, b_p)
        outs, off = [], 0
        for n in lengths:
            outs.append(y[off:off + n])
            off += n
        return tuple(outs)

    # -- public API ----------------------------------------------------------
    def __call__(self, x):
        if isinstance(x, (list, tuple)):
            if len(x) == 0:
                return []
            return list(self._fwd_list(tuple(x), self.w_p, self.b_p))
        return self._fwd_single(x, self.w_p, self.b_p)
    # TODO(synk): the PyTorch wrapper's __getattr__ forwarding to the inner
    # module is Python-level plumbing with no kernel equivalent.


if __name__ == "__main__":
    key = jax.random.PRNGKey(0)
    k_w, k_b, k_w2, k_b2, k0, k1, k2, k3, k4, k5 = jax.random.split(key, 10)

    # --- inner Linear #1: lane-dense 128 -> 128 (resident-weight path) ------
    hin1, hout1 = 128, 128
    w1 = jax.random.normal(k_w, (hin1, hout1), dtype=jnp.float32) * 0.1
    b1 = jax.random.normal(k_b, (hout1,), dtype=jnp.float32) * 0.1
    wrap_f32 = VariableLengthWrapperPallas(w1, b1, compute_dtype=jnp.float32)
    wrap_bf16 = VariableLengthWrapperPallas(w1, b1)   # default bf16 compute

    xs = [
        jax.random.normal(k0, (8, hin1), dtype=jnp.float32),
        jax.random.normal(k1, (10, hin1), dtype=jnp.float32),
        jax.random.normal(k2, (600, hin1), dtype=jnp.float32),  # multi row-tile
    ]
    x_single = jax.random.normal(k3, (10, hin1), dtype=jnp.float32)

    outs = wrap_f32(xs)                 # list path: one fused jit + one launch
    out_single = wrap_f32(x_single)     # single-tensor path
    outs_bf16 = wrap_bf16(xs)           # bf16 compute, f32 accumulate

    # --- inner Linear #2: ragged dims (200 -> 320), forced N/K tiling -------
    hin2, hout2 = 200, 320
    w2 = jax.random.normal(k_w2, (hin2, hout2), dtype=jnp.float32) * 0.1
    b2 = jax.random.normal(k_b2, (hout2,), dtype=jnp.float32) * 0.1
    wrap_tiled = VariableLengthWrapperPallas(
        w2, b2, compute_dtype=jnp.float32, block_n=128, block_k=128)
    xs2 = [
        jax.random.normal(k4, (7, hin2), dtype=jnp.float32),
        jax.random.normal(k5, (130, hin2), dtype=jnp.float32),
    ]
    outs2 = wrap_tiled(xs2)             # exercises K accumulation + N tiling

    outs = [jax.block_until_ready(o) for o in outs]
    out_single = jax.block_until_ready(out_single)
    outs_bf16 = [jax.block_until_ready(o) for o in outs_bf16]
    outs2 = [jax.block_until_ready(o) for o in outs2]

    ok = True

    # f32 path vs plain-JAX reference.
    for x, o in zip(xs, outs):
        ref = x @ w1 + b1
        ok = ok and (o.shape == ref.shape)
        ok = ok and bool(jnp.allclose(o, ref, atol=1e-4, rtol=1e-4))
    ref_single = x_single @ w1 + b1
    ok = ok and (out_single.shape == ref_single.shape)
    ok = ok and bool(jnp.allclose(out_single, ref_single, atol=1e-4, rtol=1e-4))

    # bf16 compute path vs bf16-cast reference (f32 accumulation both sides).
    w1_bf = w1.astype(jnp.bfloat16).astype(jnp.float32)
    for x, o in zip(xs, outs_bf16):
        x_bf = x.astype(jnp.bfloat16).astype(jnp.float32)
        ref = x_bf @ w1_bf + b1
        ok = ok and (o.shape == ref.shape)
        ok = ok and bool(jnp.allclose(o, ref, atol=5e-3, rtol=5e-3))

    # N/K-tiled path (ragged hidden dims, zero-padded K and N, sliced back).
    for x, o in zip(xs2, outs2):
        ref = x @ w2 + b2
        ok = ok and (o.shape == ref.shape)
        ok = ok and bool(jnp.allclose(o, ref, atol=1e-4, rtol=1e-4))

    print("KERNEL_OK" if ok else "MISMATCH")
</pallas_src>

<mosaic_0001>
module attributes {stable_mosaic.version = 11 : i64} {
  func.func @_linear_kernel(%arg0: i32, %arg1: i32, %arg2: i32, %arg3: memref<128x128xf32, #tpu.memory_space<vmem>>, %arg4: memref<128x128xf32, #tpu.memory_space<vmem>>, %arg5: memref<1x128xf32, #tpu.memory_space<vmem>>, %arg6: memref<128x128xf32, #tpu.memory_space<vmem>>, %arg7: memref<128x128xf32, #tpu.memory_space<vmem>>) attributes {dimension_semantics = [#tpu.dimension_semantics<parallel>, #tpu.dimension_semantics<parallel>, #tpu.dimension_semantics<arbitrary>], iteration_bounds = array<i64: 5, 1, 1>, scalar_prefetch = 0 : i64, scratch_operands = 1 : i64, tpu.core_type = #tpu.core_type<tc>, window_params = [{transform_indices = @transform_0, window_bounds = array<i64: 128, 128>}, {pipeline_mode = #tpu.pipeline_mode<synchronous>, transform_indices = @transform_1, window_bounds = array<i64: 128, 128>}, {transform_indices = @transform_2, window_bounds = array<i64: 1, 128>}, {transform_indices = @transform_3, window_bounds = array<i64: 128, 128>}]} {
    %c0_i32 = arith.constant 0 : i32
    %0 = arith.cmpi eq, %arg2, %c0_i32 : i32
    %1 = arith.extui %0 : i1 to i32
    %c0_i32_0 = arith.constant 0 : i32
    %2 = arith.cmpi ne, %1, %c0_i32_0 : i32
    scf.if %2 {
      %cst_10 = arith.constant 0.000000e+00 : f32
      %12 = vector.broadcast %cst_10 : f32 to vector<128x128xf32>
      %c0_11 = arith.constant 0 : index
      %c0_12 = arith.constant 0 : index
      %13 = vector.load %arg7[%c0_11, %c0_12] : memref<128x128xf32, #tpu.memory_space<vmem>>, vector<128x128xf32>
      tpu.vector_store %arg7[%c0_11, %c0_12], %12 {strides = array<i32>} : memref<128x128xf32, #tpu.memory_space<vmem>>, vector<128x128xf32>,
    } else {
    }
    %c0 = arith.constant 0 : index
    %c0_1 = arith.constant 0 : index
    %3 = vector.load %arg7[%c0, %c0_1] : memref<128x128xf32, #tpu.memory_space<vmem>>, vector<128x128xf32>
    %c0_2 = arith.constant 0 : index
    %c0_3 = arith.constant 0 : index
    %4 = vector.load %arg3[%c0_2, %c0_3] : memref<128x128xf32, #tpu.memory_space<vmem>>, vector<128x128xf32>
    %c0_4 = arith.constant 0 : index
    %c0_5 = arith.constant 0 : index
    %5 = vector.load %arg4[%c0_4, %c0_5] : memref<128x128xf32, #tpu.memory_space<vmem>>, vector<128x128xf32>
    %cst = arith.constant dense<0.000000e+00> : vector<128x128xf32>
    %6 = tpu.matmul %4, %5, %cst {dimension_numbers = #tpu.dot_dimension_numbers<[1], [0], [0], [1], [0, 0, 1, 1], [], []>} : vector<128x128xf32>, vector<128x128xf32>, vector<128x128xf32> -> vector<128x128xf32>
    %7 = arith.addf %3, %6 : vector<128x128xf32>
    %c0_6 = arith.constant 0 : index
    %c0_7 = arith.constant 0 : index
    %8 = vector.load %arg7[%c0_6, %c0_7] : memref<128x128xf32, #tpu.memory_space<vmem>>, vector<128x128xf32>
    tpu.vector_store %arg7[%c0_6, %c0_7], %7 {strides = array<i32>} : memref<128x128xf32, #tpu.memory_space<vmem>>, vector<128x128xf32>,
    %c0_i32_8 = arith.constant 0 : i32
    %9 = arith.cmpi eq, %arg2, %c0_i32_8 : i32
    %10 = arith.extui %9 : i1 to i32
    %c0_i32_9 = arith.constant 0 : i32
    %11 = arith.cmpi ne, %10, %c0_i32_9 : i32
    scf.if %11 {
      %c0_10 = arith.constant 0 : index
      %c0_11 = arith.constant 0 : index
      %12 = vector.load %arg7[%c0_10, %c0_11] : memref<128x128xf32, #tpu.memory_space<vmem>>, vector<128x128xf32>
      %c0_12 = arith.constant 0 : index
      %c0_13 = arith.constant 0 : index
      %13 = vector.load %arg5[%c0_12, %c0_13] : memref<1x128xf32, #tpu.memory_space<vmem>>, vector<1x128xf32>
      %14 = vector.broadcast %13 : vector<1x128xf32> to vector<128x128xf32>
      %15 = arith.addf %12, %14 : vector<128x128xf32>
      %c0_14 = arith.constant 0 : index
      %c0_15 = arith.constant 0 : index
      %16 = vector.load %arg6[%c0_14, %c0_15] : memref<128x128xf32, #tpu.memory_space<vmem>>, vector<128x128xf32>
      tpu.vector_store %arg6[%c0_14, %c0_15], %15 {strides = array<i32>} : memref<128x128xf32, #tpu.memory_space<vmem>>, vector<128x128xf32>,
    } else {
    }
    return
  }
  func.func @transform_0(%arg0: i32, %arg1: i32, %arg2: i32) -> (i32, i32) {
    %c0_i32 = arith.constant 0 : i32
    return %arg0, %arg2 : i32, i32
  }
  func.func @transform_1(%arg0: i32, %arg1: i32, %arg2: i32) -> (i32, i32) {
    %c0_i32 = arith.constant 0 : i32
    %c0_i32_0 = arith.constant 0 : i32
    %c0_i32_1 = arith.constant 0 : i32
    return %c0_i32, %c0_i32_0 : i32, i32
  }
  func.func @transform_2(%arg0: i32, %arg1: i32, %arg2: i32) -> (i32, i32) {
    %c0_i32 = arith.constant 0 : i32
    %c0_i32_0 = arith.constant 0 : i32
    return %c0_i32, %arg1 : i32, i32
  }
  func.func @transform_3(%arg0: i32, %arg1: i32, %arg2: i32) -> (i32, i32) {
    %c0_i32 = arith.constant 0 : i32
    return %arg0, %arg1 : i32, i32
  }
}

</mosaic_0001>

<llo_original>
// kernel: _forward_list.1
$region0: #{_forward_list.1}
  #allocation0 [shape = 'u32[]', space=smem, size = 0x4, offset = 0x4, fixed_abs, tag = 'smem constant byte address 0x4 - core index']
  #allocation1 [shape = 'u32[72,128]{1,0:T(1,128)}', space=vmem, size = 0x9000, scoped, tag = 'internal scratch']
  #allocation2 [shape = 'f32[128,128]{1,0:T(8,128)}', space=vmem, size = 0x10000, scoped, tag = 'scratch operand']
  %s0 = inlined_call_operand.vmem [shape: f32[640,128], index: 0, kind: input, shape index: {}]
  %s1 = inlined_call_operand.vmem [shape: f32[128,128], index: 1, kind: input, shape index: {}]
  %s2 = inlined_call_operand.vmem [shape: f32[1,128], index: 2, kind: input, shape index: {}]
  %s3 = inlined_call_operand.vmem [shape: f32[640,128], index: 3, kind: output, shape index: {}]
  %s4 = sld [smem:[#allocation0]]
  $region53: #{_forward_list.1} parent=0
    _
  %s6 = ssub.s32 1, %s4
  %s7 = scalar_select 0, %s6, %s4
  loop: start=0, step=1, limit=7
  $region2: #{_forward_list.1} parent=0 // loop_pre_header
    _
  $region3: #{_forward_list.1} parent=0 // loop_header
    %s9 = sphi 0, %s13
    %p10 = scmp.ge.s32.totalorder %s9, 7
    %s16 = sphi 0, %s35
    %s17 = sphi 0, %s31
    %s18 = sphi 0, %s27
    %s19 = sphi 0, %s16
    %s20 = sphi 0, %s17
    %s21 = sphi 0, %s18
    %s22 = sphi 0, %s19
    %s23 = sphi 0, %s20
    %s24 = sphi 0, %s21
    %s40 = sphi 0, %s42
    %s43 = sphi 0, %s40
    %s44 = sphi 0, %s43
    %s60 = sphi 0, %s44
    %s64 = sphi 0, %s64
    %s66 = sphi 0, %s64
    %s67 = sphi 0, %s66
    %s81 = sphi 0, %s67
    %s87 = sphi 0, %s89
    %s90 = sphi 0, %s87
    %s91 = sphi 0, %s90
    %s107 = sphi 0, %s91
    %s115 = sphi 0, %s117
    %s118 = sphi 0, %s115
    %s119 = sphi 0, %s118
    %s135 = sphi 0, %s119
  $region4: #{_forward_list.1} parent=0 // loop_header_branch
    %12 = sbr.rel (%p10) target = $region8
  $region5: #{_forward_list.1} parent=0 // loop_body
    %s14 = ssub.s32 %s9, 1
    %s15 = ssub.s32 %s9, 2
    %s25 = sadd.s32 1, %s18
    %p26 = scmp.ge.s32.totalorder %s25, 1
    %s27 = scalar_select %p26, 0, %s25
    %s28 = sadd.s32 1, %s17
    %s29 = scalar_select %p26, %s28, %s17
    %p30 = scmp.ge.s32.totalorder %s29, 1
    %s31 = scalar_select %p30, 0, %s29
    %s32 = sadd.s32 1, %s16
    %s33 = scalar_select %p30, %s32, %s16
    %p34 = scmp.ge.s32.totalorder %s33, 5
    %s35 = scalar_select %p34, 0, %s33
    %s36 = ssub.s32 %s16, %s35
    %s37 = ssub.s32 %s18, %s27
    %s38 = sor.u32 %s36, %s37
    %p39 = scmp.eq.s32.totalorder %s38, 0
    %s41 = sadd.s32 %s40, 1
    %s42 = scalar_select %p39, %s40, %s41
    %p45 = pneg %p39
    %p46 = scmp.eq.s32.totalorder %s9, 4
    %p47 = por %p45, %p46
    %p48 = scmp.ne.s32.totalorder %s40, %s43
    %p49 = scmp.eq.s32.totalorder %s9, 0
    %p50 = por %p48, %p49
    %p51 = scmp.ne.s32.totalorder %s40, %s43
    %p52 = scmp.eq.s32.totalorder %s14, 4
    %p53 = por %p51, %p52
    %p54 = scmp.ne.s32.totalorder %s43, %s44
    %p55 = scmp.eq.s32.totalorder %s14, 0
    %p56 = por %p54, %p55
    %p57 = scmp.ne.s32.totalorder %s43, %s44
    %p58 = scmp.eq.s32.totalorder %s15, 4
    %p59 = por %p57, %p58
    %p61 = scmp.ne.s32.totalorder %s44, %s60
    %p62 = scmp.eq.s32.totalorder %s15, 0
    %p63 = por %p61, %p62
    %s65 = sadd.s32 %s64, 1
    %p68 = scmp.eq.s32.totalorder %s9, 4
    %p69 = scmp.ne.s32.totalorder %s64, %s66
    %p70 = scmp.eq.s32.totalorder %s9, 0
    %p71 = por %p69, %p70
    %p72 = scmp.ne.s32.totalorder %s64, %s66
    %p73 = scmp.eq.s32.totalorder %s14, 4
    %p74 = por %p72, %p73
    %p75 = scmp.ne.s32.totalorder %s66, %s67
    %p76 = scmp.eq.s32.totalorder %s14, 0
    %p77 = por %p75, %p76
    %p78 = scmp.ne.s32.totalorder %s66, %s67
    %p79 = scmp.eq.s32.totalorder %s15, 4
    %p80 = por %p78, %p79
    %p82 = scmp.ne.s32.totalorder %s67, %s81
    %p83 = scmp.eq.s32.totalorder %s15, 0
    %p84 = por %p82, %p83
    %s85 = ssub.s32 %s17, %s31
    %p86 = scmp.eq.s32.totalorder %s85, 0
    %s88 = sadd.s32 %s87, 1
    %s89 = scalar_select %p86, %s87, %s88
    %p92 = pneg %p86
    %p93 = scmp.eq.s32.totalorder %s9, 4
    %p94 = por %p92, %p93
    %p95 = scmp.ne.s32.totalorder %s87, %s90
    %p96 = scmp.eq.s32.totalorder %s9, 0
    %p97 = por %p95, %p96
    %p98 = scmp.ne.s32.totalorder %s87, %s90
    %p99 = scmp.eq.s32.totalorder %s14, 4
    %p100 = por %p98, %p99
    %p101 = scmp.ne.s32.totalorder %s90, %s91
    %p102 = scmp.eq.s32.totalorder %s14, 0
    %p103 = por %p101, %p102
    %p104 = scmp.ne.s32.totalorder %s90, %s91
    %p105 = scmp.eq.s32.totalorder %s15, 4
    %p106 = por %p104, %p105
    %p108 = scmp.ne.s32.totalorder %s91, %s107
    %p109 = scmp.eq.s32.totalorder %s15, 0
    %p110 = por %p108, %p109
    %s111 = ssub.s32 %s16, %s35
    %s112 = ssub.s32 %s17, %s31
    %s113 = sor.u32 %s111, %s112
    %p114 = scmp.eq.s32.totalorder %s113, 0
    %s116 = sadd.s32 %s115, 1
    %s117 = scalar_select %p114, %s115, %s116
    %p120 = pneg %p114
    %p121 = scmp.eq.s32.totalorder %s9, 4
    %p122 = por %p120, %p121
    %p123 = scmp.ne.s32.totalorder %s115, %s118
    %p124 = scmp.eq.s32.totalorder %s9, 0
    %p125 = por %p123, %p124
    %p126 = scmp.ne.s32.totalorder %s115, %s118
    %p127 = scmp.eq.s32.totalorder %s14, 4
    %p128 = por %p126, %p127
    %p129 = scmp.ne.s32.totalorder %s118, %s119
    %p130 = scmp.eq.s32.totalorder %s14, 0
    %p131 = por %p129, %p130
    %p132 = scmp.ne.s32.totalorder %s118, %s119
    %p133 = scmp.eq.s32.totalorder %s15, 4
    %p134 = por %p132, %p133
    %p136 = scmp.ne.s32.totalorder %s119, %s135
    %p137 = scmp.eq.s32.totalorder %s15, 0
    %p138 = por %p136, %p137
    %p139 = scmp.le.s32.totalorder 1, %s9
    %p140 = scmp.lt.s32.totalorder %s9, 6
    %p141 = pnand %p139, %p140
    %p142 = pneg %p141
    // Predicated region
    $region9: #{_forward_list.1} parent=5 // pred_check
      _
    $region10: #{_forward_list.1} parent=5 // pred_check_branch
      %144 = sbr.rel (%p141) target = $region12
    $region11: #{_forward_list.1} parent=5 // pred_region
      %s145 = ssub.s32 %s9, 1
      // Predicated region
      $region13: #{_forward_list.1} parent=11 // pred_check
        %p146 = pneg %p77
      $region14: #{_forward_list.1} parent=11 // pred_check_branch
        %148 = sbr.rel (%p146) target = $region16
      $region15: #{_forward_list.1} parent=11 // pred_region
        _
      $region16: #{_forward_list.1} parent=11 // pred_fallthru
        _
      // Predicated region
      $region17: #{_forward_list.1} parent=11 // pred_check
        %p149 = pneg %p103
      $region18: #{_forward_list.1} parent=11 // pred_check_branch
        %151 = sbr.rel (%p149) target = $region20
      $region19: #{_forward_list.1} parent=11 // pred_region
        %p152 = scmp.lt.s32.totalorder %s20, 0
        %s153 = scalar_select %p152, %s20, 0
        %s154 = scalar_lea.vmem %s2, %s153
      $region20: #{_forward_list.1} parent=11 // pred_fallthru
        _
    $region12: #{_forward_list.1} parent=5 // pred_fallthru
      _
    %p155 = scmp.lt.s32.totalorder %s9, 5
    // Predicated region
    $region21: #{_forward_list.1} parent=5 // pred_check
      %p156 = pneg %p155
    $region22: #{_forward_list.1} parent=5 // pred_check_branch
      %158 = sbr.rel (%p156) target = $region24
    $region23: #{_forward_list.1} parent=5 // pred_region
      // Predicated region
      $region25: #{_forward_list.1} parent=23 // pred_check
        %p159 = pneg %p50
      $region26: #{_forward_list.1} parent=23 // pred_check_branch
        %161 = sbr.rel (%p159) target = $region28
      $region27: #{_forward_list.1} parent=23 // pred_region
        %s162 = smul.u32 16, %s16
        %p163 = scmp.lt.s32.totalorder %s162, 79
        %s164 = scalar_select %p163, %s162, 79
        %p165 = scmp.lt.s32.totalorder %s18, 0
        %s166 = scalar_select %p165, %s18, 0
        %s167 = sadd.s32 %s166, %s164
        %s168 = smul.addr %s167, 8
        %s169 = scalar_lea.vmem %s0, %s168
        %s170 = smul.u32 16, %s16
      $region28: #{_forward_list.1} parent=23 // pred_fallthru
        _
    $region24: #{_forward_list.1} parent=5 // pred_fallthru
      _
    %p171 = scmp.le.s32.totalorder 1, %s9
    %p172 = scmp.lt.s32.totalorder %s9, 6
    %p173 = pnand %p171, %p172
    %p174 = pneg %p173
    // Predicated region
    $region29: #{_forward_list.1} parent=5 // pred_check
      _
    $region30: #{_forward_list.1} parent=5 // pred_check_branch
      %176 = sbr.rel (%p173) target = $region32
    $region31: #{_forward_list.1} parent=5 // pred_region
      %s177 = ssub.s32 %s9, 1
      %s178 = smul.u32 16, %s19
      %p179 = scmp.lt.s32.totalorder %s178, 79
      %s180 = scalar_select %p179, %s178, 79
      %p181 = scmp.lt.s32.totalorder %s21, 0
      %s182 = scalar_select %p181, %s21, 0
      %s183 = sadd.s32 %s182, %s180
      %s184 = smul.addr %s183, 8
      %s185 = scalar_lea.vmem %s0, %s184
      %p186 = pneg %p56
      %p187 = pneg %p53
      %p188 = pneg %p77
      %p189 = pneg %p74
      %p190 = scmp.lt.s32.totalorder %s20, 0
      %s191 = scalar_select %p190, %s20, 0
      %s192 = scalar_lea.vmem %s2, %s191
      %p193 = pneg %p103
      %p194 = pneg %p100
      %p195 = pneg %p131
      %p196 = pneg %p128
      %s197 = smul.u32 16, %s19
      %p198 = scmp.lt.s32.totalorder %s197, 79
      %s199 = scalar_select %p198, %s197, 79
      %p200 = scmp.lt.s32.totalorder %s20, 0
      %s201 = scalar_select %p200, %s20, 0
      %s202 = sadd.s32 %s201, %s199
      %s203 = smul.addr %s202, 8
      %s204 = scalar_lea.vmem %s3, %s203
      %s205 = smul.u32 16, %s19
      %p206 = scmp.lt.s32.totalorder %s205, 79
      %s207 = scalar_select %p206, %s205, 79
      %p208 = scmp.lt.s32.totalorder %s21, 0
      %s209 = scalar_select %p208, %s21, 0
      %s210 = sadd.s32 %s209, %s207
      %s211 = smul.addr %s210, 8
      %s212 = scalar_lea.vmem %s0, %s211
      %s213 = smul.u32 16, %s19
      %p214 = scmp.lt.s32.totalorder %s20, 0
      %s215 = scalar_select %p214, %s20, 0
      %s216 = scalar_lea.vmem %s2, %s215
      %s217 = smul.u32 16, %s19
      %p218 = scmp.lt.s32.totalorder %s217, 79
      %s219 = scalar_select %p218, %s217, 79
      %p220 = scmp.lt.s32.totalorder %s20, 0
      %s221 = scalar_select %p220, %s20, 0
      %s222 = sadd.s32 %s221, %s219
      %s223 = smul.addr %s222, 8
      %s224 = scalar_lea.vmem %s3, %s223
      %s225 = smul.u32 16, %s19
      %p226 = scmp.eq.s32.totalorder %s21, 0
      // Predicated region
      $region33: #{_forward_list.1} parent=31 // pred_check
        %p227 = pneg %p226
      $region34: #{_forward_list.1} parent=31 // pred_check_branch
        %229 = sbr.rel (%p227) target = $region36
      $region35: #{_forward_list.1} parent=31 // pred_region
        %230 = vst [vmem:[#allocation2] sm:$0xff] 0.0
        %231 = vst [vmem:[#allocation2 + $0x8] sm:$0xff] 0.0
        %232 = vst [vmem:[#allocation2 + $0x10] sm:$0xff] 0.0
        %233 = vst [vmem:[#allocation2 + $0x18] sm:$0xff] 0.0
        %234 = vst [vmem:[#allocation2 + $0x20] sm:$0xff] 0.0
        %235 = vst [vmem:[#allocation2 + $0x28] sm:$0xff] 0.0
        %236 = vst [vmem:[#allocation2 + $0x30] sm:$0xff] 0.0
        %237 = vst [vmem:[#allocation2 + $0x38] sm:$0xff] 0.0
        %238 = vst [vmem:[#allocation2 + $0x40] sm:$0xff] 0.0
        %239 = vst [vmem:[#allocation2 + $0x48] sm:$0xff] 0.0
        %240 = vst [vmem:[#allocation2 + $0x50] sm:$0xff] 0.0
        %241 = vst [vmem:[#allocation2 + $0x58] sm:$0xff] 0.0
        %242 = vst [vmem:[#allocation2 + $0x60] sm:$0xff] 0.0
        %243 = vst [vmem:[#allocation2 + $0x68] sm:$0xff] 0.0
        %244 = vst [vmem:[#allocation2 + $0x70] sm:$0xff] 0.0
        %245 = vst [vmem:[#allocation2 + $0x78] sm:$0xff] 0.0
      $region36: #{_forward_list.1} parent=31 // pred_fallthru
        _
      %v246 = vld [vmem:[#allocation2] sm:$0xff]
      %v247 = vld [vmem:[#allocation2 + $0x8] sm:$0xff]
      %v248 = vld [vmem:[#allocation2 + $0x10] sm:$0xff]
      %v249 = vld [vmem:[#allocation2 + $0x18] sm:$0xff]
      %v250 = vld [vmem:[#allocation2 + $0x20] sm:$0xff]
      %v251 = vld [vmem:[#allocation2 + $0x28] sm:$0xff]
      %v252 = vld [vmem:[#allocation2 + $0x30] sm:$0xff]
      %v253 = vld [vmem:[#allocation2 + $0x38] sm:$0xff]
      %v254 = vld [vmem:[#allocation2 + $0x40] sm:$0xff]
      %v255 = vld [vmem:[#allocation2 + $0x48] sm:$0xff]
      %v256 = vld [vmem:[#allocation2 + $0x50] sm:$0xff]
      %v257 = vld [vmem:[#allocation2 + $0x58] sm:$0xff]
      %v258 = vld [vmem:[#allocation2 + $0x60] sm:$0xff]
      %v259 = vld [vmem:[#allocation2 + $0x68] sm:$0xff]
      %v260 = vld [vmem:[#allocation2 + $0x70] sm:$0xff]
      %v261 = vld [vmem:[#allocation2 + $0x78] sm:$0xff]
      %v262 = vld [vmem:[%s212] sm:$0xff]
      %v263 = vld [vmem:[%s212 + $0x8] sm:$0xff]
      %v264 = vld [vmem:[%s212 + $0x10] sm:$0xff]
      %v265 = vld [vmem:[%s212 + $0x18] sm:$0xff]
      %v266 = vld [vmem:[%s212 + $0x20] sm:$0xff]
      %v267 = vld [vmem:[%s212 + $0x28] sm:$0xff]
      %v268 = vld [vmem:[%s212 + $0x30] sm:$0xff]
      %v269 = vld [vmem:[%s212 + $0x38] sm:$0xff]
      %v270 = vld [vmem:[%s212 + $0x40] sm:$0xff]
      %v271 = vld [vmem:[%s212 + $0x48] sm:$0xff]
      %v272 = vld [vmem:[%s212 + $0x50] sm:$0xff]
      %v273 = vld [vmem:[%s212 + $0x58] sm:$0xff]
      %v274 = vld [vmem:[%s212 + $0x60] sm:$0xff]
      %v275 = vld [vmem:[%s212 + $0x68] sm:$0xff]
      %v276 = vld [vmem:[%s212 + $0x70] sm:$0xff]
      %v277 = vld [vmem:[%s212 + $0x78] sm:$0xff]
      %v278 = vld [vmem:[%s1] sm:$0xff]
      %v279 = vld [vmem:[%s1 + $0x8] sm:$0xff]
      %v280 = vld [vmem:[%s1 + $0x10] sm:$0xff]
      %v281 = vld [vmem:[%s1 + $0x18] sm:$0xff]
      %v282 = vld [vmem:[%s1 + $0x20] sm:$0xff]
      %v283 = vld [vmem:[%s1 + $0x28] sm:$0xff]
      %v284 = vld [vmem:[%s1 + $0x30] sm:$0xff]
      %v285 = vld [vmem:[%s1 + $0x38] sm:$0xff]
      %v286 = vld [vmem:[%s1 + $0x40] sm:$0xff]
      %v287 = vld [vmem:[%s1 + $0x48] sm:$0xff]
      %v288 = vld [vmem:[%s1 + $0x50] sm:$0xff]
      %v289 = vld [vmem:[%s1 + $0x58] sm:$0xff]
      %v290 = vld [vmem:[%s1 + $0x60] sm:$0xff]
      %v291 = vld [vmem:[%s1 + $0x68] sm:$0xff]
      %v292 = vld [vmem:[%s1 + $0x70] sm:$0xff]
      %v293 = vld [vmem:[%s1 + $0x78] sm:$0xff]
      %294 = vmatpush.msra.mxu0 %v293
      %295 = vmatpush.msra.mxu0 %v292
      %296 = vmatpush.msra.mxu0 %v291
      %297 = vmatpush.msra.mxu0 %v290
      %298 = vmatpush.msra.mxu0 %v289
      %299 = vmatpush.msra.mxu0 %v288
      %300 = vmatpush.msra.mxu0 %v287
      %301 = vmatpush.msra.mxu0 %v286
      %302 = vmatpush.msra.mxu0 %v285
      %303 = vmatpush.msra.mxu0 %v284
      %304 = vmatpush.msra.mxu0 %v283
      %305 = vmatpush.msra.mxu0 %v282
      %306 = vmatpush.msra.mxu0 %v281
      %307 = vmatpush.msra.mxu0 %v280
      %308 = vmatpush.msra.mxu0 %v279
      %309 = vmatpush.msra.mxu0 %v278
      %310 = vmatmul.f32.gmra.mxu0 %v262
      %v311 = vpop.f32.mrf.mxu0
      %v312 = vadd.f32 0.0, %v311
      %313 = vmatmul.f32.gmra.mxu0 %v263
      %v314 = vpop.f32.mrf.mxu0
      %v315 = vadd.f32 0.0, %v314
      %316 = vmatmul.f32.gmra.mxu0 %v264
      %v317 = vpop.f32.mrf.mxu0
      %v318 = vadd.f32 0.0, %v317
      %319 = vmatmul.f32.gmra.mxu0 %v265
      %v320 = vpop.f32.mrf.mxu0
      %v321 = vadd.f32 0.0, %v320
      %322 = vmatmul.f32.gmra.mxu0 %v266
      %v323 = vpop.f32.mrf.mxu0
      %v324 = vadd.f32 0.0, %v323
      %325 = vmatmul.f32.gmra.mxu0 %v267
      %v326 = vpop.f32.mrf.mxu0
      %v327 = vadd.f32 0.0, %v326
      %328 = vmatmul.f32.gmra.mxu0 %v268
      %v329 = vpop.f32.mrf.mxu0
      %v330 = vadd.f32 0.0, %v329
      %331 = vmatmul.f32.gmra.mxu0 %v269
      %v332 = vpop.f32.mrf.mxu0
      %v333 = vadd.f32 0.0, %v332
      %334 = vmatmul.f32.gmra.mxu0 %v270
      %v335 = vpop.f32.mrf.mxu0
      %v336 = vadd.f32 0.0, %v335
      %337 = vmatmul.f32.gmra.mxu0 %v271
      %v338 = vpop.f32.mrf.mxu0
      %v339 = vadd.f32 0.0, %v338
      %340 = vmatmul.f32.gmra.mxu0 %v272
      %v341 = vpop.f32.mrf.mxu0
      %v342 = vadd.f32 0.0, %v341
      %343 = vmatmul.f32.gmra.mxu0 %v273
      %v344 = vpop.f32.mrf.mxu0
      %v345 = vadd.f32 0.0, %v344
      %346 = vmatmul.f32.gmra.mxu0 %v274
      %v347 = vpop.f32.mrf.mxu0
      %v348 = vadd.f32 0.0, %v347
      %349 = vmatmul.f32.gmra.mxu0 %v275
      %v350 = vpop.f32.mrf.mxu0
      %v351 = vadd.f32 0.0, %v350
      %352 = vmatmul.f32.gmra.mxu0 %v276
      %v353 = vpop.f32.mrf.mxu0
      %v354 = vadd.f32 0.0, %v353
      %355 = vmatmul.f32.gmra.mxu0 %v277
      %v356 = vpop.f32.mrf.mxu0
      %v357 = vadd.f32 0.0, %v356
      %358 = vdwg.mxu0
      %v359 = vadd.f32 %v246, %v312
      %v360 = vadd.f32 %v247, %v315
      %v361 = vadd.f32 %v248, %v318
      %v362 = vadd.f32 %v249, %v321
      %v363 = vadd.f32 %v250, %v324
      %v364 = vadd.f32 %v251, %v327
      %v365 = vadd.f32 %v252, %v330
      %v366 = vadd.f32 %v253, %v333
      %v367 = vadd.f32 %v254, %v336
      %v368 = vadd.f32 %v255, %v339
      %v369 = vadd.f32 %v256, %v342
      %v370 = vadd.f32 %v257, %v345
      %v371 = vadd.f32 %v258, %v348
      %v372 = vadd.f32 %v259, %v351
      %v373 = vadd.f32 %v260, %v354
      %v374 = vadd.f32 %v261, %v357
      %375 = vst [vmem:[#allocation2] sm:$0xff] %v359
      %376 = vst [vmem:[#allocation2 + $0x8] sm:$0xff] %v360
      %377 = vst [vmem:[#allocation2 + $0x10] sm:$0xff] %v361
      %378 = vst [vmem:[#allocation2 + $0x18] sm:$0xff] %v362
      %379 = vst [vmem:[#allocation2 + $0x20] sm:$0xff] %v363
      %380 = vst [vmem:[#allocation2 + $0x28] sm:$0xff] %v364
      %381 = vst [vmem:[#allocation2 + $0x30] sm:$0xff] %v365
      %382 = vst [vmem:[#allocation2 + $0x38] sm:$0xff] %v366
      %383 = vst [vmem:[#allocation2 + $0x40] sm:$0xff] %v367
      %384 = vst [vmem:[#allocation2 + $0x48] sm:$0xff] %v368
      %385 = vst [vmem:[#allocation2 + $0x50] sm:$0xff] %v369
      %386 = vst [vmem:[#allocation2 + $0x58] sm:$0xff] %v370
      %387 = vst [vmem:[#allocation2 + $0x60] sm:$0xff] %v371
      %388 = vst [vmem:[#allocation2 + $0x68] sm:$0xff] %v372
      %389 = vst [vmem:[#allocation2 + $0x70] sm:$0xff] %v373
      %390 = vst [vmem:[#allocation2 + $0x78] sm:$0xff] %v374
      // Predicated region
      $region37: #{_forward_list.1} parent=31 // pred_check
        %p391 = pneg %p226
      $region38: #{_forward_list.1} parent=31 // pred_check_branch
        %393 = sbr.rel (%p391) target = $region40
      $region39: #{_forward_list.1} parent=31 // pred_region
        %v394 = vld [vmem:[#allocation2] sm:$0xff]
        %v395 = vld [vmem:[#allocation2 + $0x8] sm:$0xff]
        %v396 = vld [vmem:[#allocation2 + $0x10] sm:$0xff]
        %v397 = vld [vmem:[#allocation2 + $0x18] sm:$0xff]
        %v398 = vld [vmem:[#allocation2 + $0x20] sm:$0xff]
        %v399 = vld [vmem:[#allocation2 + $0x28] sm:$0xff]
        %v400 = vld [vmem:[#allocation2 + $0x30] sm:$0xff]
        %v401 = vld [vmem:[#allocation2 + $0x38] sm:$0xff]
        %v402 = vld [vmem:[#allocation2 + $0x40] sm:$0xff]
        %v403 = vld [vmem:[#allocation2 + $0x48] sm:$0xff]
        %v404 = vld [vmem:[#allocation2 + $0x50] sm:$0xff]
        %v405 = vld [vmem:[#allocation2 + $0x58] sm:$0xff]
        %v406 = vld [vmem:[#allocation2 + $0x60] sm:$0xff]
        %v407 = vld [vmem:[#allocation2 + $0x68] sm:$0xff]
        %v408 = vld [vmem:[#allocation2 + $0x70] sm:$0xff]
        %v409 = vld [vmem:[#allocation2 + $0x78] sm:$0xff]
        %v410 = vld [vmem:[%s216] sm:$0x1]
        %v412 = vperm.slane %v410, 0
        %v414 = vadd.f32 %v394, %v412
        %v415 = vadd.f32 %v395, %v412
        %v416 = vadd.f32 %v396, %v412
        %v417 = vadd.f32 %v397, %v412
        %v418 = vadd.f32 %v398, %v412
        %v419 = vadd.f32 %v399, %v412
        %v420 = vadd.f32 %v400, %v412
        %v421 = vadd.f32 %v401, %v412
        %v422 = vadd.f32 %v402, %v412
        %v423 = vadd.f32 %v403, %v412
        %v424 = vadd.f32 %v404, %v412
        %v425 = vadd.f32 %v405, %v412
        %v426 = vadd.f32 %v406, %v412
        %v427 = vadd.f32 %v407, %v412
        %v428 = vadd.f32 %v408, %v412
        %v429 = vadd.f32 %v409, %v412
        %430 = vst [vmem:[%s224] sm:$0xff] %v414
        %431 = vst [vmem:[%s224 + $0x8] sm:$0xff] %v415
        %432 = vst [vmem:[%s224 + $0x10] sm:$0xff] %v416
        %433 = vst [vmem:[%s224 + $0x18] sm:$0xff] %v417
        %434 = vst [vmem:[%s224 + $0x20] sm:$0xff] %v418
        %435 = vst [vmem:[%s224 + $0x28] sm:$0xff] %v419
        %436 = vst [vmem:[%s224 + $0x30] sm:$0xff] %v420
        %437 = vst [vmem:[%s224 + $0x38] sm:$0xff] %v421
        %438 = vst [vmem:[%s224 + $0x40] sm:$0xff] %v422
        %439 = vst [vmem:[%s224 + $0x48] sm:$0xff] %v423
        %440 = vst [vmem:[%s224 + $0x50] sm:$0xff] %v424
        %441 = vst [vmem:[%s224 + $0x58] sm:$0xff] %v425
        %442 = vst [vmem:[%s224 + $0x60] sm:$0xff] %v426
        %443 = vst [vmem:[%s224 + $0x68] sm:$0xff] %v427
        %444 = vst [vmem:[%s224 + $0x70] sm:$0xff] %v428
        %445 = vst [vmem:[%s224 + $0x78] sm:$0xff] %v429
      $region40: #{_forward_list.1} parent=31 // pred_fallthru
        _
      %s446 = smul.u32 16, %s19
      %p447 = scmp.lt.s32.totalorder %s446, 79
      %s448 = scalar_select %p447, %s446, 79
      %p449 = scmp.lt.s32.totalorder %s20, 0
      %s450 = scalar_select %p449, %s20, 0
      %s451 = sadd.s32 %s450, %s448
      %s452 = smul.addr %s451, 8
      %s453 = scalar_lea.vmem %s3, %s452
      // Predicated region
      $region41: #{_forward_list.1} parent=31 // pred_check
        %p454 = pneg %p128
      $region42: #{_forward_list.1} parent=31 // pred_check_branch
        %456 = sbr.rel (%p454) target = $region44
      $region43: #{_forward_list.1} parent=31 // pred_region
        %s457 = smul.u32 16, %s19
      $region44: #{_forward_list.1} parent=31 // pred_fallthru
        _
    $region32: #{_forward_list.1} parent=5 // pred_fallthru
      _
    %p458 = scmp.le.s32.totalorder 2, %s9
    // Predicated region
    $region45: #{_forward_list.1} parent=5 // pred_check
      %p459 = pneg %p458
    $region46: #{_forward_list.1} parent=5 // pred_check_branch
      %461 = sbr.rel (%p459) target = $region48
    $region47: #{_forward_list.1} parent=5 // pred_region
      %s462 = ssub.s32 %s9, 2
      // Predicated region
      $region49: #{_forward_list.1} parent=47 // pred_check
        %p463 = pneg %p134
      $region50: #{_forward_list.1} parent=47 // pred_check_branch
        %465 = sbr.rel (%p463) target = $region52
      $region51: #{_forward_list.1} parent=47 // pred_region
        %s466 = smul.u32 16, %s22
        %p467 = scmp.lt.s32.totalorder %s466, 79
        %s468 = scalar_select %p467, %s466, 79
        %p469 = scmp.lt.s32.totalorder %s23, 0
        %s470 = scalar_select %p469, %s23, 0
        %s471 = sadd.s32 %s470, %s468
        %s472 = smul.addr %s471, 8
        %s473 = scalar_lea.vmem %s3, %s472
      $region52: #{_forward_list.1} parent=47 // pred_fallthru
        _
    $region48: #{_forward_list.1} parent=5 // pred_fallthru
      _
  $region6: #{_forward_list.1} parent=0 // loop_footer
    %s13 = sadd.s32 1, %s9
  $region7: #{_forward_list.1} parent=0 // loop_footer_branch
    %8 = sbr.rel target = $region3
  $region8: #{_forward_list.1} parent=0 // loop_exit
    _

</llo_original>
